<compile_context>
chip_gen: v6e
topology: v6e:2x2x1
jax: 0.10.0
libtpu: 0.0.40
codegen_flags: <defaults>
</compile_context>

<pallas_src>
import jax
import jax.numpy as jnp
from jax import lax
from jax.experimental import pallas as pl
from jax.experimental.pallas import tpu as pltpu


# ----------------------------------------------------------------------------
# Kernel
# ----------------------------------------------------------------------------
def _make_max_argmax_kernel(vocab_size: int, tile_v: int, need_v_mask: bool):
    """Build the tiled max/argmax kernel (vocab_size, tile_v are trace-time)."""

    def kernel(x_ref, maxv_ref, argm_ref, m_acc, a_acc):
        # grid = (row_blocks, vocab_blocks); vocab axis is last + "arbitrary"
        k = pl.program_id(1)

        @pl.when(k == 0)
        def _():
            m_acc[...] = jnp.full_like(m_acc, -jnp.inf)
            a_acc[...] = jnp.zeros_like(a_acc)

        # HBM->VMEM DMA happened in the native dtype; upcast per tile only.
        x = x_ref[...].astype(jnp.float32)            # (tile_n, tile_v)
        n, v = x.shape

        # lane index within this vocab tile (needed for argmax anyway)
        lane = lax.broadcasted_iota(jnp.int32, (n, v), 1)

        if need_v_mask:
            # Last vocab tile is ragged: out-of-range lanes must never win.
            # TODO(synk): rows that are entirely NaN fall back to index 0 here,
            # whereas torch/jnp argmax treat NaN as the maximum.
            x = jnp.where(lane + k * tile_v < vocab_size, x, -jnp.inf)

        # per-row max over the lane (vocab) axis
        m_loc = jnp.max(x, axis=-1, keepdims=True)    # (tile_n, 1)

        # first maximal index inside this tile, promoted to a global vocab index
        # (select folded into the iota -> only one extra full-tile temporary)
        a_loc = jnp.min(jnp.where(x == m_loc, lane, tile_v),
                        axis=-1, keepdims=True) + k * tile_v

        # running combine across vocab tiles; strict '>' keeps the first
        # tile (and, within it, the first lane) that attains the maximum,
        # matching torch/jnp argmax tie behavior.
        better = m_loc > m_acc[...]
        a_acc[...] = jnp.where(better, a_loc, a_acc[...])
        m_acc[...] = jnp.where(better, m_loc, m_acc[...])

        @pl.when(k == pl.num_programs(1) - 1)
        def _():
            maxv_ref[...] = m_acc[...]
            argm_ref[...] = a_acc[...]

    return kernel


# ----------------------------------------------------------------------------
# Wrapper
# ----------------------------------------------------------------------------
@jax.jit
def greedy_max_argmax(predicts: jnp.ndarray):
    """predicts: (B, T, V) float (any float dtype).

    Returns (max values (B, T) float32, argmax indices (B, T) int32).
    """
    B, T, V = predicts.shape
    N = B * T
    x2d = predicts.reshape(N, V)                      # free view, native dtype

    itemsize = jnp.dtype(predicts.dtype).itemsize

    # Row tile: up to 512 rows (multiple of 8); full N when small.
    tile_n = N if N <= 512 else 512

    # Vocab tile: ~2 MiB per input buffer at tile_n=512 (so 2x buffers + f32
    # temporaries stay well inside every generation's scoped VMEM, including
    # v7x's 64 MiB physical / 32 MiB scoped and v5e's 16 MiB default).
    tile_v_cap = max(512, ((2 * 1024 * 1024) // (512 * itemsize)) // 128 * 128)
    tile_v = V if V <= tile_v_cap else tile_v_cap
    need_v_mask = (V % tile_v) != 0

    grid = (pl.cdiv(N, tile_n), pl.cdiv(V, tile_v))

    maxv, argm = pl.pallas_call(
        _make_max_argmax_kernel(V, tile_v, need_v_mask),
        out_shape=(
            jax.ShapeDtypeStruct((N, 1), jnp.float32),
            jax.ShapeDtypeStruct((N, 1), jnp.int32),
        ),
        grid=grid,
        in_specs=[pl.BlockSpec((tile_n, tile_v), lambda i, k: (i, k))],
        out_specs=(
            pl.BlockSpec((tile_n, 1), lambda i, k: (i, 0)),
            pl.BlockSpec((tile_n, 1), lambda i, k: (i, 0)),
        ),
        scratch_shapes=[
            pltpu.VMEM((tile_n, 1), jnp.float32),     # running max
            pltpu.VMEM((tile_n, 1), jnp.int32),       # running argmax
        ],
        compiler_params=pltpu.CompilerParams(
            # rows are embarrassingly parallel (2 TCs on v7x); vocab axis is
            # the reduction -> last + arbitrary.
            dimension_semantics=("parallel", "arbitrary"),
            vmem_limit_bytes=32 * 1024 * 1024,
        ),
    )(x2d)

    return maxv.reshape(B, T), argm.reshape(B, T)


# ----------------------------------------------------------------------------
# Host-side glue (mirrors seq2seq_greedy_decoder)
# ----------------------------------------------------------------------------
class SimpleVocab:
    """Deterministic synthetic vocab: index i -> a printable character."""

    def __init__(self, size: int):
        self.size = size
        self._chars = [chr(ord('a') + (i % 26)) for i in range(size)]

    def int2char(self, i: int) -> str:
        return self._chars[int(i) % self.size]


class Seq2SeqGreedyDecoder:
    """JAX/Pallas port of the PyTorch Seq2SeqGreedyDecoder forward pass."""

    def __init__(self, vocab: SimpleVocab, keep_eos: bool = True):
        self.vocab = vocab
        self.keep_eos = keep_eos

    def __call__(self, predicts: jnp.ndarray, lengths):
        # predicts: (B, T, V)
        lengths = [int(l) for l in lengths]
        if not self.keep_eos:
            lengths = [l - 1 for l in lengths]

        probs, indices = greedy_max_argmax(predicts)       # Pallas kernel (hot path)

        # single device->host transfer for both arrays (blocks on completion)
        probs_np, indices_np = jax.device_get((probs, indices))
        probs_l = probs_np.tolist()
        indices_l = indices_np.tolist()

        # TODO(synk): string building / length slicing is host-side Python glue
        # (same as the original module's .cpu().tolist() loop) - no Pallas op.
        strings, char_probs = [], []
        for p_row, i_row, length in zip(probs_l, indices_l, lengths):
            strings.append(''.join(self.vocab.int2char(i) for i in i_row[:length]))
            char_probs.append(p_row[:length])
        return strings, char_probs


# ----------------------------------------------------------------------------
# Self-test
# ----------------------------------------------------------------------------
def _check(key, B, T, V, dtype):
    x = jax.random.normal(key, (B, T, V), dtype=jnp.float32).astype(dtype)
    k_probs, k_idx = greedy_max_argmax(x)
    jax.block_until_ready((k_probs, k_idx))
    ref_probs = jnp.max(x, axis=-1).astype(jnp.float32)
    ref_idx = jnp.argmax(x, axis=-1).astype(jnp.int32)
    assert jnp.allclose(k_probs, ref_probs), f"max mismatch for {(B, T, V, dtype)}"
    assert jnp.array_equal(k_idx, ref_idx), f"argmax mismatch for {(B, T, V, dtype)}"


if __name__ == "__main__":
    key = jax.random.PRNGKey(0)
    B, T, V = 2, 8, 32
    predicts = jax.random.normal(key, (B, T, V), dtype=jnp.float32)
    lengths = [5, 8]

    vocab = SimpleVocab(V)
    decoder = Seq2SeqGreedyDecoder(vocab, keep_eos=True)
    strings, char_probs = decoder(predicts, lengths)
    assert len(strings) == B and len(char_probs[0]) == lengths[0]

    # correctness vs pure-JAX reference on several tiling regimes
    k0, k1, k2, k3 = jax.random.split(key, 4)
    _check(k0, 2, 8, 32, jnp.float32)       # single tile (module demo shape)
    _check(k1, 2, 8, 32, jnp.bfloat16)      # native bf16 HBM read, per-tile upcast
    _check(k2, 3, 7, 2500, jnp.float32)     # multiple vocab tiles + ragged vocab tail
    _check(k3, 1, 520, 384, jnp.float32)    # multiple row tiles + ragged row tail

    print("KERNEL_OK")
</pallas_src>

<mosaic_0001>
module attributes {stable_mosaic.version = 11 : i64} {
  func.func @kernel(%arg0: i32, %arg1: i32, %arg2: memref<16x32xf32, #tpu.memory_space<vmem>>, %arg3: memref<16x1xf32, #tpu.memory_space<vmem>>, %arg4: memref<16x1xi32, #tpu.memory_space<vmem>>, %arg5: memref<16x1xf32, #tpu.memory_space<vmem>>, %arg6: memref<16x1xi32, #tpu.memory_space<vmem>>) attributes {dimension_semantics = [#tpu.dimension_semantics<parallel>, #tpu.dimension_semantics<arbitrary>], iteration_bounds = array<i64: 1, 1>, scalar_prefetch = 0 : i64, scratch_operands = 2 : i64, tpu.core_type = #tpu.core_type<tc>, window_params = [{transform_indices = @transform_0, window_bounds = array<i64: 16, 32>}, {transform_indices = @transform_1, window_bounds = array<i64: 16, 1>}, {transform_indices = @transform_2, window_bounds = array<i64: 16, 1>}]} {
    %c0_i32 = arith.constant 0 : i32
    %0 = arith.cmpi eq, %arg1, %c0_i32 : i32
    %1 = arith.extui %0 : i1 to i32
    %c0_i32_0 = arith.constant 0 : i32
    %2 = arith.cmpi ne, %1, %c0_i32_0 : i32
    scf.if %2 {
      %cst_16 = arith.constant 0xFF800000 : f32
      %27 = vector.broadcast %cst_16 : f32 to vector<16x1xf32>
      %c0_17 = arith.constant 0 : index
      %c0_18 = arith.constant 0 : index
      %28 = vector.load %arg5[%c0_17, %c0_18] : memref<16x1xf32, #tpu.memory_space<vmem>>, vector<16x1xf32>
      tpu.vector_store %arg5[%c0_17, %c0_18], %27 {strides = array<i32>} : memref<16x1xf32, #tpu.memory_space<vmem>>, vector<16x1xf32>,
      %c0_i32_19 = arith.constant 0 : i32
      %29 = vector.broadcast %c0_i32_19 : i32 to vector<16x1xi32>
      %c0_20 = arith.constant 0 : index
      %c0_21 = arith.constant 0 : index
      %30 = vector.load %arg6[%c0_20, %c0_21] : memref<16x1xi32, #tpu.memory_space<vmem>>, vector<16x1xi32>
      tpu.vector_store %arg6[%c0_20, %c0_21], %29 {strides = array<i32>} : memref<16x1xi32, #tpu.memory_space<vmem>>, vector<16x1xi32>,
    } else {
    }
    %c0 = arith.constant 0 : index
    %c0_1 = arith.constant 0 : index
    %3 = vector.load %arg2[%c0, %c0_1] : memref<16x32xf32, #tpu.memory_space<vmem>>, vector<16x32xf32>
    %4 = tpu.iota {dimensions = array<i32: 1>} : vector<16x32xi32>
    %cst = arith.constant dense<0xFF800000> : vector<16xf32>
    %5 = vector.multi_reduction <maximumf>, %3, %cst [1] : vector<16x32xf32> to vector<16xf32>
    %6 = vector.shape_cast %5 : vector<16xf32> to vector<16x1xf32>
    %7 = vector.broadcast %6 : vector<16x1xf32> to vector<16x32xf32>
    %8 = arith.cmpf oeq, %3, %7 : vector<16x32xf32>
    %c32_i32 = arith.constant 32 : i32
    %9 = vector.broadcast %c32_i32 : i32 to vector<16x32xi32>
    %10 = arith.select %8, %4, %9 : vector<16x32xi1>, vector<16x32xi32>
    %cst_2 = arith.constant dense<2147483647> : vector<16xi32>
    %11 = vector.multi_reduction <minsi>, %10, %cst_2 [1] : vector<16x32xi32> to vector<16xi32>
    %12 = vector.shape_cast %11 : vector<16xi32> to vector<16x1xi32>
    %c32_i32_3 = arith.constant 32 : i32
    %13 = arith.muli %arg1, %c32_i32_3 : i32
    %14 = vector.broadcast %13 : i32 to vector<16x1xi32>
    %15 = arith.addi %12, %14 : vector<16x1xi32>
    %c0_4 = arith.constant 0 : index
    %c0_5 = arith.constant 0 : index
    %16 = vector.load %arg5[%c0_4, %c0_5] : memref<16x1xf32, #tpu.memory_space<vmem>>, vector<16x1xf32>
    %17 = arith.cmpf ogt, %6, %16 : vector<16x1xf32>
    %c0_6 = arith.constant 0 : index
    %c0_7 = arith.constant 0 : index
    %18 = vector.load %arg6[%c0_6, %c0_7] : memref<16x1xi32, #tpu.memory_space<vmem>>, vector<16x1xi32>
    %19 = arith.select %17, %15, %18 : vector<16x1xi1>, vector<16x1xi32>
    %c0_8 = arith.constant 0 : index
    %c0_9 = arith.constant 0 : index
    %20 = vector.load %arg6[%c0_8, %c0_9] : memref<16x1xi32, #tpu.memory_space<vmem>>, vector<16x1xi32>
    tpu.vector_store %arg6[%c0_8, %c0_9], %19 {strides = array<i32>} : memref<16x1xi32, #tpu.memory_space<vmem>>, vector<16x1xi32>,
    %c0_10 = arith.constant 0 : index
    %c0_11 = arith.constant 0 : index
    %21 = vector.load %arg5[%c0_10, %c0_11] : memref<16x1xf32, #tpu.memory_space<vmem>>, vector<16x1xf32>
    %22 = arith.select %17, %6, %21 : vector<16x1xi1>, vector<16x1xf32>
    %c0_12 = arith.constant 0 : index
    %c0_13 = arith.constant 0 : index
    %23 = vector.load %arg5[%c0_12, %c0_13] : memref<16x1xf32, #tpu.memory_space<vmem>>, vector<16x1xf32>
    tpu.vector_store %arg5[%c0_12, %c0_13], %22 {strides = array<i32>} : memref<16x1xf32, #tpu.memory_space<vmem>>, vector<16x1xf32>,
    %c0_i32_14 = arith.constant 0 : i32
    %24 = arith.cmpi eq, %arg1, %c0_i32_14 : i32
    %25 = arith.extui %24 : i1 to i32
    %c0_i32_15 = arith.constant 0 : i32
    %26 = arith.cmpi ne, %25, %c0_i32_15 : i32
    scf.if %26 {
      %c0_16 = arith.constant 0 : index
      %c0_17 = arith.constant 0 : index
      %27 = vector.load %arg5[%c0_16, %c0_17] : memref<16x1xf32, #tpu.memory_space<vmem>>, vector<16x1xf32>
      %c0_18 = arith.constant 0 : index
      %c0_19 = arith.constant 0 : index
      %28 = vector.load %arg3[%c0_18, %c0_19] : memref<16x1xf32, #tpu.memory_space<vmem>>, vector<16x1xf32>
      tpu.vector_store %arg3[%c0_18, %c0_19], %27 {strides = array<i32>} : memref<16x1xf32, #tpu.memory_space<vmem>>, vector<16x1xf32>,
      %c0_20 = arith.constant 0 : index
      %c0_21 = arith.constant 0 : index
      %29 = vector.load %arg6[%c0_20, %c0_21] : memref<16x1xi32, #tpu.memory_space<vmem>>, vector<16x1xi32>
      %c0_22 = arith.constant 0 : index
      %c0_23 = arith.constant 0 : index
      %30 = vector.load %arg4[%c0_22, %c0_23] : memref<16x1xi32, #tpu.memory_space<vmem>>, vector<16x1xi32>
      tpu.vector_store %arg4[%c0_22, %c0_23], %29 {strides = array<i32>} : memref<16x1xi32, #tpu.memory_space<vmem>>, vector<16x1xi32>,
    } else {
    }
    return
  }
  func.func @transform_0(%arg0: i32, %arg1: i32) -> (i32, i32) {
    %c0_i32 = arith.constant 0 : i32
    return %arg0, %arg1 : i32, i32
  }
  func.func @transform_1(%arg0: i32, %arg1: i32) -> (i32, i32) {
    %c0_i32 = arith.constant 0 : i32
    %c0_i32_0 = arith.constant 0 : i32
    return %arg0, %c0_i32 : i32, i32
  }
  func.func @transform_2(%arg0: i32, %arg1: i32) -> (i32, i32) {
    %c0_i32 = arith.constant 0 : i32
    %c0_i32_0 = arith.constant 0 : i32
    return %arg0, %c0_i32 : i32, i32
  }
}

</mosaic_0001>

<llo_original>
// kernel: greedy_max_argmax.1
$region0: #{greedy_max_argmax.1}
  #allocation0 [shape = 'u32[]', space=smem, size = 0x4, offset = 0x4, fixed_abs, tag = 'smem constant byte address 0x4 - core index']
  #allocation1 [shape = 'u32[144,128]{1,0:T(1,128)}', space=vmem, size = 0x12000, scoped, tag = 'internal scratch']
  #allocation2 [shape = 'f32[16,1]{1,0:T(8,128)}', space=vmem, size = 0x2000, scoped, tag = 'scratch operand']
  #allocation3 [shape = 's32[16,1]{1,0:T(8,128)}', space=vmem, size = 0x2000, scoped, tag = 'scratch operand']
  %s0 = inlined_call_operand.hbm [shape: f32[16,32], index: 0, kind: input, shape index: {}]
  %s1 = inlined_call_operand.vmem [shape: f32[16,1], index: 1, kind: output, shape index: {0}]
  %s2 = inlined_call_operand.vmem [shape: s32[16,1], index: 2, kind: output, shape index: {1}]
  %3 = xla_tuple %s1, %s2
  %s4 = sld [smem:[#allocation0]]
  $region34: #{greedy_max_argmax.1} parent=0
    _
  %s6 = ssub.s32 1, %s4
  %s7 = scalar_select 0, %s6, %s4
  $region1: #{greedy_max_argmax.1} parent=0
    #allocation4 [shape = 'u8[8192]{0}', space=vmem, size = 0x2000, scoped, tag = 'input window, operand 0, single buffered']
    #allocation5 [shape = 's32[1]{0}', space=sflag, size = 0x4, scoped, tag = 'scoped memory for greedy_max_argmax.1']
    %8 = vsyncpa [#allocation5], 0
    // Predicated region
    $region2: #{greedy_max_argmax.1} parent=1 // pred_check
      _
    $region3: #{greedy_max_argmax.1} parent=1 // pred_check_branch
      %10 = sbr.rel (0) target = $region5
    $region4: #{greedy_max_argmax.1} parent=1 // pred_region
      %s12 = ssub.s32 256, 256
      %13 = vsyncadd [#allocation5], %s12
      %s14 = sshll.u32 [#allocation4], 4
      %s15 = int_to_ptr.vmem [resolvable:$true] %s14
      %20 = dma.hbm_to_vmem [thread:$0]  %s0, 256, %s15, [#allocation5], 128, 128, 8
    $region5: #{greedy_max_argmax.1} parent=1 // pred_fallthru
      _
    // Predicated region
    $region6: #{greedy_max_argmax.1} parent=1 // pred_check
      _
    $region7: #{greedy_max_argmax.1} parent=1 // pred_check_branch
      %22 = sbr.rel (0) target = $region9
    $region8: #{greedy_max_argmax.1} parent=1 // pred_region
      %23 = dma.done [#allocation5], 256
    $region9: #{greedy_max_argmax.1} parent=1 // pred_fallthru
      _
    %p24 = scmp.eq.s32.totalorder 0, 0
    // Predicated region
    $region10: #{greedy_max_argmax.1} parent=1 // pred_check
      %p25 = pneg %p24
    $region11: #{greedy_max_argmax.1} parent=1 // pred_check_branch
      %27 = sbr.rel (%p25) target = $region13
    $region12: #{greedy_max_argmax.1} parent=1 // pred_region
      %vm28 = vcmask 7168
      %29 = vst.msk [vmem:[#allocation2] sm:$0xff] %vm28, -inf
      %30 = vst.msk [vmem:[#allocation2 + $0x8] sm:$0xff] %vm28, -inf
      %31 = vst.msk [vmem:[#allocation3] sm:$0xff] %vm28, 0
      %32 = vst.msk [vmem:[#allocation3 + $0x8] sm:$0xff] %vm28, 0
    $region13: #{greedy_max_argmax.1} parent=1 // pred_fallthru
      _
    %v33 = vld [vmem:[#allocation4] sm:$0xff]
    %v34 = vld [vmem:[#allocation4 + $0x8] sm:$0xff]
    %v35 = vlaneseq
    %v36 = vand.u32 %v35, 127
    %vm37 = vcmask 261120
    %v38 = vsel %vm37, %v33, -inf
    %39 = vmax.xlane.f32.xlu0 %v38
    %v40 = vpop.xlane.xlu0 %39
    %v41 = vsel %vm37, %v34, -inf
    %42 = vmax.xlane.f32.xlu0 %v41
    %v43 = vpop.xlane.xlu0 %42
    %vm44 = vcmp.eq.f32.partialorder %v33, %v40
    %vm45 = vcmp.eq.f32.partialorder %v34, %v43
    %v46 = vsel %vm44, %v36, 32
    %v47 = vsel %vm45, %v36, 32
    %v48 = vsel %vm37, %v46, 2147483647
    %v49 = vand.u32 %v48, 65535
    %v50 = vshra.s32 %v48, 16
    %v51 = vcvt.s32.f32 %v49
    %v52 = vcvt.s32.f32 %v50
    %53 = vmin.xlane.f32.xlu0 %v52
    %v54 = vpop.xlane.xlu0 %53
    %vm55 = vcmp.eq.f32.partialorder %v52, %v54
    %v56 = vsel %vm55, %v51, inf
    %57 = vmin.xlane.f32.xlu0 %v56
    %v58 = vpop.xlane.xlu0 %57
    %v59 = vcvt.f32.s32 %v58
    %v60 = vcvt.f32.s32 %v54
    %v61 = vshll.u32 %v60, 16
    %v62 = vadd.s32 %v61, %v59
    %v63 = vsel %vm37, %v47, 2147483647
    %v64 = vand.u32 %v63, 65535
    %v65 = vshra.s32 %v63, 16
    %v66 = vcvt.s32.f32 %v64
    %v67 = vcvt.s32.f32 %v65
    %68 = vmin.xlane.f32.xlu0 %v67
    %v69 = vpop.xlane.xlu0 %68
    %vm70 = vcmp.eq.f32.partialorder %v67, %v69
    %v71 = vsel %vm70, %v66, inf
    %72 = vmin.xlane.f32.xlu0 %v71
    %v73 = vpop.xlane.xlu0 %72
    %v74 = vcvt.f32.s32 %v73
    %v75 = vcvt.f32.s32 %v69
    %v76 = vshll.u32 %v75, 16
    %v77 = vadd.s32 %v76, %v74
    %s78 = smul.u32 0, 32
    %v79 = vstv %s78
    %v80 = vadd.s32 %v62, %v79
    %v81 = vadd.s32 %v77, %v79
    %v82 = vld [vmem:[#allocation2] sm:$0xff]
    %v83 = vld [vmem:[#allocation2 + $0x8] sm:$0xff]
    %vm84 = vcmp.gt.f32.partialorder %v40, %v82
    %vm85 = vcmp.gt.f32.partialorder %v43, %v83
    %v86 = vld [vmem:[#allocation3] sm:$0xff]
    %v87 = vld [vmem:[#allocation3 + $0x8] sm:$0xff]
    %v88 = vsel %vm84, %v80, %v86
    %v89 = vsel %vm85, %v81, %v87
    %vm90 = vcmask 7168
    %91 = vst.msk [vmem:[#allocation3] sm:$0xff] %vm90, %v88
    %92 = vst.msk [vmem:[#allocation3 + $0x8] sm:$0xff] %vm90, %v89
    %v93 = vld [vmem:[#allocation2] sm:$0xff]
    %v94 = vld [vmem:[#allocation2 + $0x8] sm:$0xff]
    %v95 = vsel %vm84, %v40, %v93
    %v96 = vsel %vm85, %v43, %v94
    %97 = vst.msk [vmem:[#allocation2] sm:$0xff] %vm90, %v95
    %98 = vst.msk [vmem:[#allocation2 + $0x8] sm:$0xff] %vm90, %v96
    // Predicated region
    $region14: #{greedy_max_argmax.1} parent=1 // pred_check
      %p99 = pneg %p24
    $region15: #{greedy_max_argmax.1} parent=1 // pred_check_branch
      %101 = sbr.rel (%p99) target = $region17
    $region16: #{greedy_max_argmax.1} parent=1 // pred_region
      %v102 = vld [vmem:[#allocation2] sm:$0xff]
      %v103 = vld [vmem:[#allocation2 + $0x8] sm:$0xff]
      %104 = vst.msk [vmem:[%s1] sm:$0xff] %vm90, %v102
      %105 = vst.msk [vmem:[%s1 + $0x8] sm:$0xff] %vm90, %v103
      %v106 = vld [vmem:[#allocation3] sm:$0xff]
      %v107 = vld [vmem:[#allocation3 + $0x8] sm:$0xff]
      %108 = vst.msk [vmem:[%s2] sm:$0xff] %vm90, %v106
      %109 = vst.msk [vmem:[%s2 + $0x8] sm:$0xff] %vm90, %v107
    $region17: #{greedy_max_argmax.1} parent=1 // pred_fallthru
      _
    // Predicated region
    $region18: #{greedy_max_argmax.1} parent=1 // pred_check
      _
    $region19: #{greedy_max_argmax.1} parent=1 // pred_check_branch
      %111 = sbr.rel (0) target = $region21
    $region20: #{greedy_max_argmax.1} parent=1 // pred_region
      _
    $region21: #{greedy_max_argmax.1} parent=1 // pred_fallthru
      _
    // Predicated region
    $region22: #{greedy_max_argmax.1} parent=1 // pred_check
      _
    $region23: #{greedy_max_argmax.1} parent=1 // pred_check_branch
      %113 = sbr.rel (0) target = $region25
    $region24: #{greedy_max_argmax.1} parent=1 // pred_region
      _
    $region25: #{greedy_max_argmax.1} parent=1 // pred_fallthru
      _
    // Predicated region
    $region26: #{greedy_max_argmax.1} parent=1 // pred_check
      _
    $region27: #{greedy_max_argmax.1} parent=1 // pred_check_branch
      %115 = sbr.rel (0) target = $region29
    $region28: #{greedy_max_argmax.1} parent=1 // pred_region
      _
    $region29: #{greedy_max_argmax.1} parent=1 // pred_fallthru
      _
    // Predicated region
    $region30: #{greedy_max_argmax.1} parent=1 // pred_check
      _
    $region31: #{greedy_max_argmax.1} parent=1 // pred_check_branch
      %117 = sbr.rel (0) target = $region33
    $region32: #{greedy_max_argmax.1} parent=1 // pred_region
      _
    $region33: #{greedy_max_argmax.1} parent=1 // pred_fallthru
      _
    %118 = vsyncpa [#allocation5], 1

</llo_original>
